<compile_context>
chip_gen: v7x
topology: tpu7x:2x2x1
jax: 0.10.0
libtpu: 0.0.40
codegen_flags: <defaults>
</compile_context>

<pallas_src>
import functools

import jax
import jax.numpy as jnp
from jax import lax
from jax.experimental import pallas as pl
from jax.experimental.pallas import tpu as pltpu


# ---------------------------------------------------------------------------
# helpers
# ---------------------------------------------------------------------------
def _gelu_exact(x):
    # matches torch.nn.GELU() default (approximate='none', erf based)
    return 0.5 * x * (1.0 + lax.erf(x * 0.7071067811865476))


def _row_tile(total, preferred=256):
    # full block (always legal) when small, else a multiple-of-8 tile.
    return total if total <= preferred else preferred


def _pick_batch_tile(batch, num_patch, target_rows=512):
    # largest divisor of `batch` whose row count (tile_b * N) is a multiple of
    # 8 and stays around `target_rows`; falls back to the full batch.
    cap = max(1, min(batch, target_rows // max(num_patch, 1)))
    for t in range(cap, 0, -1):
        if batch % t == 0 and (t * num_patch) % 8 == 0:
            return t
    return batch


# ---------------------------------------------------------------------------
# kernel 1: patch embedding (conv with stride==kernel ==> linear on patches)
# ---------------------------------------------------------------------------
def _embed_kernel(p_ref, w_ref, b_ref, o_ref):
    w = w_ref[...]
    o_ref[...] = (
        jnp.dot(p_ref[...].astype(w.dtype), w, preferred_element_type=jnp.float32)
        + b_ref[...]
    )


def patch_embed(x, w_embed, b_embed, patch_size):
    B, C, H, W = x.shape
    p = patch_size
    nh, nw = H // p, W // p
    N = nh * nw
    K = C * p * p
    D = w_embed.shape[1]
    # glue: extract non-overlapping patches, flatten in (c, ph, pw) order
    patches = (
        x.reshape(B, C, nh, p, nw, p).transpose(0, 2, 4, 1, 3, 5).reshape(B * N, K)
    )

    BN = B * N
    tile_m = _row_tile(BN)
    return pl.pallas_call(
        _embed_kernel,
        out_shape=jax.ShapeDtypeStruct((BN, D), jnp.float32),
        grid=(pl.cdiv(BN, tile_m),),
        in_specs=[
            pl.BlockSpec((tile_m, K), lambda i: (i, 0)),
            pl.BlockSpec((K, D), lambda i: (0, 0)),
            pl.BlockSpec((1, D), lambda i: (0, 0)),
        ],
        out_specs=pl.BlockSpec((tile_m, D), lambda i: (i, 0)),
        compiler_params=pltpu.CompilerParams(dimension_semantics=("parallel",)),
    )(patches, w_embed, b_embed)


# ---------------------------------------------------------------------------
# kernel 2: ALL MLP blocks fused (activations resident, weights streamed)
# ---------------------------------------------------------------------------
def _fused_blocks_kernel(
    x_ref, aff_ref, wt_ref, bt_ref, w1_ref, b1_ref, w2_ref, o_ref,
    *, tile_b, num_patch, dim,
):
    rows = tile_b * num_patch

    @pl.when(pl.program_id(1) == 0)
    def _():
        o_ref[...] = x_ref[...]            # load activations once per batch tile

    x = o_ref[...]                         # (rows, dim) f32, VMEM-resident

    # packed per-layer vectors: a1, be1, g1, a2, be2, g2, ff-bias-2, pad
    a1, be1, g1 = aff_ref[0:1, :], aff_ref[1:2, :], aff_ref[2:3, :]
    a2, be2, g2 = aff_ref[3:4, :], aff_ref[4:5, :], aff_ref[5:6, :]
    b2 = aff_ref[6:7, :]

    # ---- pre-affine ----
    x = x * a1 + be1

    # ---- token mix: Linear along the patch axis, batched over samples ----
    wt = wt_ref[...]                                           # (N, N)
    xb = x.reshape(tile_b, num_patch, dim).astype(wt.dtype)
    wt_b = jnp.broadcast_to(wt, (tile_b, num_patch, num_patch))
    tok = jnp.einsum("bmn,bnd->bmd", wt_b, xb,
                     preferred_element_type=jnp.float32)
    tok = tok + bt_ref[...]                                    # (N,1) broadcast
    x = x + g1 * tok.reshape(rows, dim)

    # ---- post-affine ----
    x = x * a2 + be2

    # ---- feed-forward (M = tile_b*N fills the MXU) ----
    w1 = w1_ref[...]
    h = jnp.dot(x.astype(w1.dtype), w1, preferred_element_type=jnp.float32)
    # exact erf GELU to match torch.nn.GELU(); tanh approx would move the
    # transcendental to the EUP slot if the block ever becomes VALU-bound.
    h = _gelu_exact(h + b1_ref[...])
    w2 = w2_ref[...]
    ff = jnp.dot(h.astype(w2.dtype), w2, preferred_element_type=jnp.float32) + b2
    x = x + g2 * ff

    o_ref[...] = x


def fused_blocks(x, aff, wt, bt, w1, b1, w2, *, batch, num_patch):
    BN, D = x.shape
    depth = wt.shape[0]
    N = num_patch
    H = w1.shape[2]

    tile_b = _pick_batch_tile(batch, N)
    rows = tile_b * N
    kernel = functools.partial(
        _fused_blocks_kernel, tile_b=tile_b, num_patch=N, dim=D
    )
    return pl.pallas_call(
        kernel,
        out_shape=jax.ShapeDtypeStruct((BN, D), jnp.float32),
        grid=(batch // tile_b, depth),
        in_specs=[
            pl.BlockSpec((rows, D), lambda b, l: (b, 0)),        # activations
            pl.BlockSpec((None, 8, D), lambda b, l: (l, 0, 0)),  # packed affines
            pl.BlockSpec((None, N, N), lambda b, l: (l, 0, 0)),  # token-mix W
            pl.BlockSpec((None, N, 1), lambda b, l: (l, 0, 0)),  # token-mix b
            pl.BlockSpec((None, D, H), lambda b, l: (l, 0, 0)),  # ff W1
            pl.BlockSpec((None, 1, H), lambda b, l: (l, 0, 0)),  # ff b1
            pl.BlockSpec((None, H, D), lambda b, l: (l, 0, 0)),  # ff W2
        ],
        out_specs=pl.BlockSpec((rows, D), lambda b, l: (b, 0)),
        compiler_params=pltpu.CompilerParams(
            dimension_semantics=("parallel", "arbitrary")
        ),
    )(x, aff, wt, bt, w1, b1, w2)


# ---------------------------------------------------------------------------
# kernel 3: mean over patches + classification head (final Aff pre-folded)
# ---------------------------------------------------------------------------
def _head_kernel(x_ref, w_ref, b_ref, o_ref):
    m = jnp.mean(x_ref[...], axis=1)                        # (tile_b, D)
    o_ref[...] = (
        jnp.dot(m, w_ref[...], preferred_element_type=jnp.float32) + b_ref[...]
    )


def head(x, w_eff, b_eff):
    B, N, D = x.shape
    C = w_eff.shape[1]
    tile_b = _row_tile(B)
    return pl.pallas_call(
        _head_kernel,
        out_shape=jax.ShapeDtypeStruct((B, C), jnp.float32),
        grid=(pl.cdiv(B, tile_b),),
        in_specs=[
            pl.BlockSpec((tile_b, N, D), lambda i: (i, 0, 0)),
            pl.BlockSpec((D, C), lambda i: (0, 0)),
            pl.BlockSpec((1, C), lambda i: (0, 0)),
        ],
        out_specs=pl.BlockSpec((tile_b, C), lambda i: (i, 0)),
        compiler_params=pltpu.CompilerParams(dimension_semantics=("parallel",)),
    )(x, w_eff, b_eff)


# ---------------------------------------------------------------------------
# parameter construction (deterministic, mirrors ResMLP.__init__ shapes)
# ---------------------------------------------------------------------------
def init_params(key, in_channels, dim, num_classes, patch_size, num_patch,
                depth, mlp_dim, init_values=1e-4, weight_dtype=jnp.bfloat16):
    keys = jax.random.split(key, 4 + 6 * depth)
    it = iter(keys)

    def nrm(shape, scale=0.02):
        return (scale * jax.random.normal(next(it), shape)).astype(jnp.float32)

    D, N, H = dim, num_patch, mlp_dim
    params = {
        "w_embed": nrm((in_channels * patch_size * patch_size, D)).astype(weight_dtype),
        "b_embed": nrm((1, D)),
    }

    ones = jnp.ones((D,), jnp.float32)
    zeros = jnp.zeros((D,), jnp.float32)
    gamma = (init_values * jnp.ones((D,))).astype(jnp.float32)
    aff_rows, wts, bts, w1s, b1s, w2s = [], [], [], [], [], []
    for _ in range(depth):
        b2 = nrm((D,), scale=0.01)
        # rows: a1, be1, g1, a2, be2, g2, ff-bias-2, pad
        aff_rows.append(jnp.stack([ones, zeros, gamma, ones, zeros, gamma, b2, zeros]))
        wts.append(nrm((N, N)))
        bts.append(nrm((N, 1)))
        w1s.append(nrm((D, H)))
        b1s.append(nrm((1, H), scale=0.01))
        w2s.append(nrm((H, D)))
    params["aff"] = jnp.stack(aff_rows)                     # (depth, 8, D)  f32
    params["wt"] = jnp.stack(wts).astype(weight_dtype)      # (depth, N, N)
    params["bt"] = jnp.stack(bts)                           # (depth, N, 1)  f32
    params["w1"] = jnp.stack(w1s).astype(weight_dtype)      # (depth, D, H)
    params["b1"] = jnp.stack(b1s)                           # (depth, 1, H)  f32
    params["w2"] = jnp.stack(w2s).astype(weight_dtype)      # (depth, H, D)

    params["a_out"] = jnp.ones((1, D), jnp.float32)
    params["be_out"] = jnp.zeros((1, D), jnp.float32)
    params["w_head"] = nrm((D, num_classes))
    params["b_head"] = nrm((num_classes,))
    return params


# ---------------------------------------------------------------------------
# full forward
# ---------------------------------------------------------------------------
@functools.partial(jax.jit, static_argnames=("patch_size",))
def resmlp_forward(x, params, patch_size):
    B = x.shape[0]
    tokens = patch_embed(x, params["w_embed"], params["b_embed"], patch_size)
    BN, D = tokens.shape
    N = BN // B

    tokens = fused_blocks(
        tokens, params["aff"], params["wt"], params["bt"],
        params["w1"], params["b1"], params["w2"],
        batch=B, num_patch=N,
    )
    x3 = tokens.reshape(B, N, D)

    # fold final Aff into the head: mean(x*a+b) @ W + c == mean(x) @ (a^T*W) + (b@W + c)
    C = params["w_head"].shape[1]
    w_eff = params["a_out"].reshape(D, 1) * params["w_head"]
    b_eff = params["be_out"] @ params["w_head"] + params["b_head"].reshape(1, C)
    return head(x3, w_eff, b_eff)


# ---------------------------------------------------------------------------
if __name__ == "__main__":
    # small config: in_channels=3, dim=32, num_classes=10, patch=4,
    # image=16 -> num_patch=16, depth=2, mlp_dim=64
    B, C, H, W = 2, 3, 16, 16
    dim, num_classes, patch_size, depth, mlp_dim = 32, 10, 4, 2, 64
    num_patch = (H // patch_size) ** 2

    key = jax.random.PRNGKey(0)
    kx, kp = jax.random.split(key)
    x = jax.random.normal(kx, (B, C, H, W), dtype=jnp.float32)
    params = init_params(kp, C, dim, num_classes, patch_size, num_patch,
                         depth, mlp_dim)

    out = resmlp_forward(x, params, patch_size=patch_size)
    out = jax.block_until_ready(out)
    assert out.shape == (B, num_classes), out.shape
    print("KERNEL_OK")
</pallas_src>

<mosaic_0001>
module attributes {stable_mosaic.version = 11 : i64} {
  func.func @_embed_kernel(%arg0: i32, %arg1: memref<32x48xf32, #tpu.memory_space<vmem>>, %arg2: memref<48x32xbf16, #tpu.memory_space<vmem>>, %arg3: memref<1x32xf32, #tpu.memory_space<vmem>>, %arg4: memref<32x32xf32, #tpu.memory_space<vmem>>) attributes {dimension_semantics = [#tpu.dimension_semantics<parallel>], iteration_bounds = array<i64: 1>, scalar_prefetch = 0 : i64, scratch_operands = 0 : i64, tpu.core_type = #tpu.core_type<tc>, window_params = [{transform_indices = @transform_0, window_bounds = array<i64: 32, 48>}, {pipeline_mode = #tpu.pipeline_mode<synchronous>, transform_indices = @transform_1, window_bounds = array<i64: 48, 32>}, {pipeline_mode = #tpu.pipeline_mode<synchronous>, transform_indices = @transform_2, window_bounds = array<i64: 1, 32>}, {transform_indices = @transform_3, window_bounds = array<i64: 32, 32>}]} {
    %c0 = arith.constant 0 : index
    %c0_0 = arith.constant 0 : index
    %0 = vector.load %arg2[%c0, %c0_0] : memref<48x32xbf16, #tpu.memory_space<vmem>>, vector<48x32xbf16>
    %c0_1 = arith.constant 0 : index
    %c0_2 = arith.constant 0 : index
    %1 = vector.load %arg1[%c0_1, %c0_2] : memref<32x48xf32, #tpu.memory_space<vmem>>, vector<32x48xf32>
    %2 = arith.truncf %1 : vector<32x48xf32> to vector<32x48xbf16>
    %cst = arith.constant dense<0.000000e+00> : vector<32x32xf32>
    %3 = tpu.matmul %2, %0, %cst {dimension_numbers = #tpu.dot_dimension_numbers<[1], [0], [0], [1], [0, 0, 1, 1], [], []>} : vector<32x48xbf16>, vector<48x32xbf16>, vector<32x32xf32> -> vector<32x32xf32>
    %c0_3 = arith.constant 0 : index
    %c0_4 = arith.constant 0 : index
    %4 = vector.load %arg3[%c0_3, %c0_4] : memref<1x32xf32, #tpu.memory_space<vmem>>, vector<1x32xf32>
    %5 = vector.broadcast %4 : vector<1x32xf32> to vector<32x32xf32>
    %6 = arith.addf %3, %5 : vector<32x32xf32>
    %c0_5 = arith.constant 0 : index
    %c0_6 = arith.constant 0 : index
    %7 = vector.load %arg4[%c0_5, %c0_6] : memref<32x32xf32, #tpu.memory_space<vmem>>, vector<32x32xf32>
    tpu.vector_store %arg4[%c0_5, %c0_6], %6 {strides = array<i32>} : memref<32x32xf32, #tpu.memory_space<vmem>>, vector<32x32xf32>,
    return
  }
  func.func @transform_0(%arg0: i32) -> (i32, i32) {
    %c0_i32 = arith.constant 0 : i32
    %c0_i32_0 = arith.constant 0 : i32
    return %arg0, %c0_i32 : i32, i32
  }
  func.func @transform_1(%arg0: i32) -> (i32, i32) {
    %c0_i32 = arith.constant 0 : i32
    %c0_i32_0 = arith.constant 0 : i32
    %c0_i32_1 = arith.constant 0 : i32
    return %c0_i32, %c0_i32_0 : i32, i32
  }
  func.func @transform_2(%arg0: i32) -> (i32, i32) {
    %c0_i32 = arith.constant 0 : i32
    %c0_i32_0 = arith.constant 0 : i32
    %c0_i32_1 = arith.constant 0 : i32
    return %c0_i32, %c0_i32_0 : i32, i32
  }
  func.func @transform_3(%arg0: i32) -> (i32, i32) {
    %c0_i32 = arith.constant 0 : i32
    %c0_i32_0 = arith.constant 0 : i32
    return %arg0, %c0_i32 : i32, i32
  }
}

module attributes {stable_mosaic.version = 11 : i64} {
  func.func @_fused_blocks_kernel(%arg0: i32, %arg1: i32, %arg2: memref<32x32xf32, #tpu.memory_space<vmem>>, %arg3: memref<1x8x32xf32, #tpu.memory_space<vmem>>, %arg4: memref<1x16x16xbf16, #tpu.memory_space<vmem>>, %arg5: memref<1x16x1xf32, #tpu.memory_space<vmem>>, %arg6: memref<1x32x64xbf16, #tpu.memory_space<vmem>>, %arg7: memref<1x1x64xf32, #tpu.memory_space<vmem>>, %arg8: memref<1x64x32xbf16, #tpu.memory_space<vmem>>, %arg9: memref<32x32xf32, #tpu.memory_space<vmem>>) attributes {dimension_semantics = [#tpu.dimension_semantics<parallel>, #tpu.dimension_semantics<arbitrary>], iteration_bounds = array<i64: 1, 2>, scalar_prefetch = 0 : i64, scratch_operands = 0 : i64, tpu.core_type = #tpu.core_type<tc>, window_params = [{transform_indices = @transform_0, window_bounds = array<i64: 32, 32>}, {transform_indices = @transform_1, window_bounds = array<i64: 1, 8, 32>}, {transform_indices = @transform_2, window_bounds = array<i64: 1, 16, 16>}, {transform_indices = @transform_3, window_bounds = array<i64: 1, 16, 1>}, {transform_indices = @transform_4, window_bounds = array<i64: 1, 32, 64>}, {transform_indices = @transform_5, window_bounds = array<i64: 1, 1, 64>}, {transform_indices = @transform_6, window_bounds = array<i64: 1, 64, 32>}, {transform_indices = @transform_7, window_bounds = array<i64: 32, 32>}]} {
    %c0_i32 = arith.constant 0 : i32
    %0 = arith.cmpi eq, %arg1, %c0_i32 : i32
    %1 = arith.extui %0 : i1 to i32
    %c0_i32_0 = arith.constant 0 : i32
    %2 = arith.cmpi ne, %1, %c0_i32_0 : i32
    scf.if %2 {
      %c0_39 = arith.constant 0 : index
      %c0_40 = arith.constant 0 : index
      %68 = vector.load %arg2[%c0_39, %c0_40] : memref<32x32xf32, #tpu.memory_space<vmem>>, vector<32x32xf32>
      %c0_41 = arith.constant 0 : index
      %c0_42 = arith.constant 0 : index
      %69 = vector.load %arg9[%c0_41, %c0_42] : memref<32x32xf32, #tpu.memory_space<vmem>>, vector<32x32xf32>
      tpu.vector_store %arg9[%c0_41, %c0_42], %68 {strides = array<i32>} : memref<32x32xf32, #tpu.memory_space<vmem>>, vector<32x32xf32>,
    } else {
    }
    %c0 = arith.constant 0 : index
    %c0_1 = arith.constant 0 : index
    %3 = vector.load %arg9[%c0, %c0_1] : memref<32x32xf32, #tpu.memory_space<vmem>>, vector<32x32xf32>
    %c0_2 = arith.constant 0 : index
    %c0_3 = arith.constant 0 : index
    %c0_4 = arith.constant 0 : index
    %4 = vector.load %arg3[%c0_2, %c0_3, %c0_4] : memref<1x8x32xf32, #tpu.memory_space<vmem>>, vector<1x1x32xf32>
    %5 = vector.shape_cast %4 : vector<1x1x32xf32> to vector<1x32xf32>
    %c0_5 = arith.constant 0 : index
    %c1 = arith.constant 1 : index
    %c0_6 = arith.constant 0 : index
    %6 = vector.load %arg3[%c0_5, %c1, %c0_6] : memref<1x8x32xf32, #tpu.memory_space<vmem>>, vector<1x1x32xf32>
    %7 = vector.shape_cast %6 : vector<1x1x32xf32> to vector<1x32xf32>
    %c0_7 = arith.constant 0 : index
    %c2 = arith.constant 2 : index
    %c0_8 = arith.constant 0 : index
    %8 = vector.load %arg3[%c0_7, %c2, %c0_8] : memref<1x8x32xf32, #tpu.memory_space<vmem>>, vector<1x1x32xf32>
    %9 = vector.shape_cast %8 : vector<1x1x32xf32> to vector<1x32xf32>
    %c0_9 = arith.constant 0 : index
    %c3 = arith.constant 3 : index
    %c0_10 = arith.constant 0 : index
    %10 = vector.load %arg3[%c0_9, %c3, %c0_10] : memref<1x8x32xf32, #tpu.memory_space<vmem>>, vector<1x1x32xf32>
    %11 = vector.shape_cast %10 : vector<1x1x32xf32> to vector<1x32xf32>
    %c0_11 = arith.constant 0 : index
    %c4 = arith.constant 4 : index
    %c0_12 = arith.constant 0 : index
    %12 = vector.load %arg3[%c0_11, %c4, %c0_12] : memref<1x8x32xf32, #tpu.memory_space<vmem>>, vector<1x1x32xf32>
    %13 = vector.shape_cast %12 : vector<1x1x32xf32> to vector<1x32xf32>
    %c0_13 = arith.constant 0 : index
    %c5 = arith.constant 5 : index
    %c0_14 = arith.constant 0 : index
    %14 = vector.load %arg3[%c0_13, %c5, %c0_14] : memref<1x8x32xf32, #tpu.memory_space<vmem>>, vector<1x1x32xf32>
    %15 = vector.shape_cast %14 : vector<1x1x32xf32> to vector<1x32xf32>
    %c0_15 = arith.constant 0 : index
    %c6 = arith.constant 6 : index
    %c0_16 = arith.constant 0 : index
    %16 = vector.load %arg3[%c0_15, %c6, %c0_16] : memref<1x8x32xf32, #tpu.memory_space<vmem>>, vector<1x1x32xf32>
    %17 = vector.shape_cast %16 : vector<1x1x32xf32> to vector<1x32xf32>
    %18 = vector.broadcast %5 : vector<1x32xf32> to vector<32x32xf32>
    %19 = arith.mulf %3, %18 : vector<32x32xf32>
    %20 = vector.broadcast %7 : vector<1x32xf32> to vector<32x32xf32>
    %21 = arith.addf %19, %20 : vector<32x32xf32>
    %c0_17 = arith.constant 0 : index
    %c0_18 = arith.constant 0 : index
    %c0_19 = arith.constant 0 : index
    %22 = vector.load %arg4[%c0_17, %c0_18, %c0_19] : memref<1x16x16xbf16, #tpu.memory_space<vmem>>, vector<1x16x16xbf16>
    %23 = vector.shape_cast %22 : vector<1x16x16xbf16> to vector<16x16xbf16>
    %24 = vector.shape_cast %21 : vector<32x32xf32> to vector<2x16x32xf32>
    %25 = arith.truncf %24 : vector<2x16x32xf32> to vector<2x16x32xbf16>
    %26 = vector.shape_cast %23 : vector<16x16xbf16> to vector<1x16x16xbf16>
    %27 = vector.broadcast %26 : vector<1x16x16xbf16> to vector<2x16x16xbf16>
    "tpu.trace_start"() <{level = 10 : i32, message = "bmn,bnd->bmd"}> : () -> ()
    %cst = arith.constant dense<0.000000e+00> : vector<2x16x32xf32>
    %28 = tpu.matmul %27, %25, %cst {dimension_numbers = #tpu.dot_dimension_numbers<[2], [1], [1], [2], [0, 0, 0, 1, 1, 2], [0], [0]>} : vector<2x16x16xbf16>, vector<2x16x32xbf16>, vector<2x16x32xf32> -> vector<2x16x32xf32>
    "tpu.trace_stop"() : () -> ()
    %c0_20 = arith.constant 0 : index
    %c0_21 = arith.constant 0 : index
    %c0_22 = arith.constant 0 : index
    %29 = vector.load %arg5[%c0_20, %c0_21, %c0_22] : memref<1x16x1xf32, #tpu.memory_space<vmem>>, vector<1x16x1xf32>
    %30 = vector.shape_cast %29 : vector<1x16x1xf32> to vector<16x1xf32>
    %31 = vector.shape_cast %30 : vector<16x1xf32> to vector<1x16x1xf32>
    %32 = vector.broadcast %31 : vector<1x16x1xf32> to vector<2x16x32xf32>
    %33 = arith.addf %28, %32 : vector<2x16x32xf32>
    %34 = vector.shape_cast %33 : vector<2x16x32xf32> to vector<32x32xf32>
    %35 = vector.broadcast %9 : vector<1x32xf32> to vector<32x32xf32>
    %36 = arith.mulf %35, %34 : vector<32x32xf32>
    %37 = arith.addf %21, %36 : vector<32x32xf32>
    %38 = vector.broadcast %11 : vector<1x32xf32> to vector<32x32xf32>
    %39 = arith.mulf %37, %38 : vector<32x32xf32>
    %40 = vector.broadcast %13 : vector<1x32xf32> to vector<32x32xf32>
    %41 = arith.addf %39, %40 : vector<32x32xf32>
    %c0_23 = arith.constant 0 : index
    %c0_24 = arith.constant 0 : index
    %c0_25 = arith.constant 0 : index
    %42 = vector.load %arg6[%c0_23, %c0_24, %c0_25] : memref<1x32x64xbf16, #tpu.memory_space<vmem>>, vector<1x32x64xbf16>
    %43 = vector.shape_cast %42 : vector<1x32x64xbf16> to vector<32x64xbf16>
    %44 = arith.truncf %41 : vector<32x32xf32> to vector<32x32xbf16>
    %cst_26 = arith.constant dense<0.000000e+00> : vector<32x64xf32>
    %45 = tpu.matmul %44, %43, %cst_26 {dimension_numbers = #tpu.dot_dimension_numbers<[1], [0], [0], [1], [0, 0, 1, 1], [], []>} : vector<32x32xbf16>, vector<32x64xbf16>, vector<32x64xf32> -> vector<32x64xf32>
    %c0_27 = arith.constant 0 : index
    %c0_28 = arith.constant 0 : index
    %c0_29 = arith.constant 0 : index
    %46 = vector.load %arg7[%c0_27, %c0_28, %c0_29] : memref<1x1x64xf32, #tpu.memory_space<vmem>>, vector<1x1x64xf32>
    %47 = vector.shape_cast %46 : vector<1x1x64xf32> to vector<1x64xf32>
    %48 = vector.broadcast %47 : vector<1x64xf32> to vector<32x64xf32>
    %49 = arith.addf %45, %48 : vector<32x64xf32>
    %cst_30 = arith.constant 5.000000e-01 : f32
    %50 = vector.broadcast %cst_30 : f32 to vector<32x64xf32>
    %51 = arith.mulf %50, %49 : vector<32x64xf32>
    %cst_31 = arith.constant 0.707106769 : f32
    %52 = vector.broadcast %cst_31 : f32 to vector<32x64xf32>
    %53 = arith.mulf %49, %52 : vector<32x64xf32>
    %54 = math.erf %53 : vector<32x64xf32>
    %cst_32 = arith.constant 1.000000e+00 : f32
    %55 = vector.broadcast %cst_32 : f32 to vector<32x64xf32>
    %56 = arith.addf %55, %54 : vector<32x64xf32>
    %57 = arith.mulf %51, %56 : vector<32x64xf32>
    %c0_33 = arith.constant 0 : index
    %c0_34 = arith.constant 0 : index
    %c0_35 = arith.constant 0 : index
    %58 = vector.load %arg8[%c0_33, %c0_34, %c0_35] : memref<1x64x32xbf16, #tpu.memory_space<vmem>>, vector<1x64x32xbf16>
    %59 = vector.shape_cast %58 : vector<1x64x32xbf16> to vector<64x32xbf16>
    %60 = arith.truncf %57 : vector<32x64xf32> to vector<32x64xbf16>
    %cst_36 = arith.constant dense<0.000000e+00> : vector<32x32xf32>
    %61 = tpu.matmul %60, %59, %cst_36 {dimension_numbers = #tpu.dot_dimension_numbers<[1], [0], [0], [1], [0, 0, 1, 1], [], []>} : vector<32x64xbf16>, vector<64x32xbf16>, vector<32x32xf32> -> vector<32x32xf32>
    %62 = vector.broadcast %17 : vector<1x32xf32> to vector<32x32xf32>
    %63 = arith.addf %61, %62 : vector<32x32xf32>
    %64 = vector.broadcast %15 : vector<1x32xf32> to vector<32x32xf32>
    %65 = arith.mulf %64, %63 : vector<32x32xf32>
    %66 = arith.addf %41, %65 : vector<32x32xf32>
    %c0_37 = arith.constant 0 : index
    %c0_38 = arith.constant 0 : index
    %67 = vector.load %arg9[%c0_37, %c0_38] : memref<32x32xf32, #tpu.memory_space<vmem>>, vector<32x32xf32>
    tpu.vector_store %arg9[%c0_37, %c0_38], %66 {strides = array<i32>} : memref<32x32xf32, #tpu.memory_space<vmem>>, vector<32x32xf32>,
    return
  }
  func.func @transform_0(%arg0: i32, %arg1: i32) -> (i32, i32) {
    %c0_i32 = arith.constant 0 : i32
    %c0_i32_0 = arith.constant 0 : i32
    return %arg0, %c0_i32 : i32, i32
  }
  func.func @transform_1(%arg0: i32, %arg1: i32) -> (i32, i32, i32) {
    %c0_i32 = arith.constant 0 : i32
    %c0_i32_0 = arith.constant 0 : i32
    %c0_i32_1 = arith.constant 0 : i32
    return %arg1, %c0_i32, %c0_i32_0 : i32, i32, i32
  }
  func.func @transform_2(%arg0: i32, %arg1: i32) -> (i32, i32, i32) {
    %c0_i32 = arith.constant 0 : i32
    %c0_i32_0 = arith.constant 0 : i32
    %c0_i32_1 = arith.constant 0 : i32
    return %arg1, %c0_i32, %c0_i32_0 : i32, i32, i32
  }
  func.func @transform_3(%arg0: i32, %arg1: i32) -> (i32, i32, i32) {
    %c0_i32 = arith.constant 0 : i32
    %c0_i32_0 = arith.constant 0 : i32
    %c0_i32_1 = arith.constant 0 : i32
    return %arg1, %c0_i32, %c0_i32_0 : i32, i32, i32
  }
  func.func @transform_4(%arg0: i32, %arg1: i32) -> (i32, i32, i32) {
    %c0_i32 = arith.constant 0 : i32
    %c0_i32_0 = arith.constant 0 : i32
    %c0_i32_1 = arith.constant 0 : i32
    return %arg1, %c0_i32, %c0_i32_0 : i32, i32, i32
  }
  func.func @transform_5(%arg0: i32, %arg1: i32) -> (i32, i32, i32) {
    %c0_i32 = arith.constant 0 : i32
    %c0_i32_0 = arith.constant 0 : i32
    %c0_i32_1 = arith.constant 0 : i32
    return %arg1, %c0_i32, %c0_i32_0 : i32, i32, i32
  }
  func.func @transform_6(%arg0: i32, %arg1: i32) -> (i32, i32, i32) {
    %c0_i32 = arith.constant 0 : i32
    %c0_i32_0 = arith.constant 0 : i32
    %c0_i32_1 = arith.constant 0 : i32
    return %arg1, %c0_i32, %c0_i32_0 : i32, i32, i32
  }
  func.func @transform_7(%arg0: i32, %arg1: i32) -> (i32, i32) {
    %c0_i32 = arith.constant 0 : i32
    %c0_i32_0 = arith.constant 0 : i32
    return %arg0, %c0_i32 : i32, i32
  }
}

module attributes {stable_mosaic.version = 11 : i64} {
  func.func @_head_kernel(%arg0: i32, %arg1: memref<2x16x32xf32, #tpu.memory_space<vmem>>, %arg2: memref<32x10xf32, #tpu.memory_space<vmem>>, %arg3: memref<1x10xf32, #tpu.memory_space<vmem>>, %arg4: memref<2x10xf32, #tpu.memory_space<vmem>>) attributes {dimension_semantics = [#tpu.dimension_semantics<parallel>], iteration_bounds = array<i64: 1>, scalar_prefetch = 0 : i64, scratch_operands = 0 : i64, tpu.core_type = #tpu.core_type<tc>, window_params = [{transform_indices = @transform_0, window_bounds = array<i64: 2, 16, 32>}, {pipeline_mode = #tpu.pipeline_mode<synchronous>, transform_indices = @transform_1, window_bounds = array<i64: 32, 10>}, {pipeline_mode = #tpu.pipeline_mode<synchronous>, transform_indices = @transform_2, window_bounds = array<i64: 1, 10>}, {transform_indices = @transform_3, window_bounds = array<i64: 2, 10>}]} {
    %c0 = arith.constant 0 : index
    %c0_0 = arith.constant 0 : index
    %c0_1 = arith.constant 0 : index
    %0 = vector.load %arg1[%c0, %c0_0, %c0_1] : memref<2x16x32xf32, #tpu.memory_space<vmem>>, vector<2x16x32xf32>
    %cst = arith.constant dense<0.000000e+00> : vector<2x32xf32>
    %1 = vector.multi_reduction <add>, %0, %cst [1] : vector<2x16x32xf32> to vector<2x32xf32>
    %cst_2 = arith.constant 1.600000e+01 : f32
    %2 = vector.broadcast %cst_2 : f32 to vector<2x32xf32>
    %3 = arith.divf %1, %2 : vector<2x32xf32>
    %c0_3 = arith.constant 0 : index
    %c0_4 = arith.constant 0 : index
    %4 = vector.load %arg2[%c0_3, %c0_4] : memref<32x10xf32, #tpu.memory_space<vmem>>, vector<32x10xf32>
    %cst_5 = arith.constant dense<0.000000e+00> : vector<2x10xf32>
    %5 = tpu.matmul %3, %4, %cst_5 {dimension_numbers = #tpu.dot_dimension_numbers<[1], [0], [0], [1], [0, 0, 1, 1], [], []>} : vector<2x32xf32>, vector<32x10xf32>, vector<2x10xf32> -> vector<2x10xf32>
    %c0_6 = arith.constant 0 : index
    %c0_7 = arith.constant 0 : index
    %6 = vector.load %arg3[%c0_6, %c0_7] : memref<1x10xf32, #tpu.memory_space<vmem>>, vector<1x10xf32>
    %7 = vector.broadcast %6 : vector<1x10xf32> to vector<2x10xf32>
    %8 = arith.addf %5, %7 : vector<2x10xf32>
    %c0_8 = arith.constant 0 : index
    %c0_9 = arith.constant 0 : index
    %9 = vector.load %arg4[%c0_8, %c0_9] : memref<2x10xf32, #tpu.memory_space<vmem>>, vector<2x10xf32>
    tpu.vector_store %arg4[%c0_8, %c0_9], %8 {strides = array<i32>} : memref<2x10xf32, #tpu.memory_space<vmem>>, vector<2x10xf32>,
    return
  }
  func.func @transform_0(%arg0: i32) -> (i32, i32, i32) {
    %c0_i32 = arith.constant 0 : i32
    %c0_i32_0 = arith.constant 0 : i32
    %c0_i32_1 = arith.constant 0 : i32
    return %arg0, %c0_i32, %c0_i32_0 : i32, i32, i32
  }
  func.func @transform_1(%arg0: i32) -> (i32, i32) {
    %c0_i32 = arith.constant 0 : i32
    %c0_i32_0 = arith.constant 0 : i32
    %c0_i32_1 = arith.constant 0 : i32
    return %c0_i32, %c0_i32_0 : i32, i32
  }
  func.func @transform_2(%arg0: i32) -> (i32, i32) {
    %c0_i32 = arith.constant 0 : i32
    %c0_i32_0 = arith.constant 0 : i32
    %c0_i32_1 = arith.constant 0 : i32
    return %c0_i32, %c0_i32_0 : i32, i32
  }
  func.func @transform_3(%arg0: i32) -> (i32, i32) {
    %c0_i32 = arith.constant 0 : i32
    %c0_i32_0 = arith.constant 0 : i32
    return %arg0, %c0_i32 : i32, i32
  }
}

</mosaic_0001>

<llo_original>
// kernel: resmlp_forward.3
$region0: #{resmlp_forward.3}
  #allocation0 [shape = 'u32[]', space=smem, size = 0x4, offset = 0x4, fixed_abs, tag = 'smem constant byte address 0x4 - core index']
  #allocation1 [shape = 'u32[144,128]{1,0:T(1,128)}', space=vmem, size = 0x12000, scoped, tag = 'internal scratch']
  %s0 = inlined_call_operand.vmem [shape: f32[32,48], index: 0, kind: input, shape index: {}]
  %s1 = inlined_call_operand.vmem [shape: bf16[48,32], index: 1, kind: input, shape index: {}]
  %s2 = inlined_call_operand.vmem [shape: f32[1,32], index: 2, kind: input, shape index: {}]
  %s3 = inlined_call_operand.vmem [shape: f32[32,32], index: 3, kind: output, shape index: {}]
  %s4 = sld [smem:[#allocation0]]
  $region22: #{resmlp_forward.3} parent=0
    _
  %s6 = ssub.s32 1, %s4
  %s7 = scalar_select 0, %s6, %s4
  // Predicated region
  $region2: #{resmlp_forward.3} parent=0 // pred_check
    _
  $region3: #{resmlp_forward.3} parent=0 // pred_check_branch
    %9 = sbr.rel (0) target = $region5
  $region4: #{resmlp_forward.3} parent=0 // pred_region
    _
  $region5: #{resmlp_forward.3} parent=0 // pred_fallthru
    _
  // Predicated region
  $region6: #{resmlp_forward.3} parent=0 // pred_check
    _
  $region7: #{resmlp_forward.3} parent=0 // pred_check_branch
    %11 = sbr.rel (0) target = $region9
  $region8: #{resmlp_forward.3} parent=0 // pred_region
    _
  $region9: #{resmlp_forward.3} parent=0 // pred_fallthru
    _
  // Predicated region
  $region10: #{resmlp_forward.3} parent=0 // pred_check
    _
  $region11: #{resmlp_forward.3} parent=0 // pred_check_branch
    %13 = sbr.rel (0) target = $region13
  $region12: #{resmlp_forward.3} parent=0 // pred_region
    _
  $region13: #{resmlp_forward.3} parent=0 // pred_fallthru
    _
  %v15 = vld [vmem:[%s1] sm:$0xf]
  %v16 = vld [vmem:[%s1 + $0x4] sm:$0xf]
  %v17 = vld [vmem:[%s1 + $0x8] sm:$0xf]
  %v18 = vld [vmem:[%s1 + $0xc] sm:$0xf]
  %v19 = vld [vmem:[%s1 + $0x10] sm:$0xf]
  %v20 = vld [vmem:[%s1 + $0x14] sm:$0xf]
  %v21 = vld [vmem:[%s0] sm:$0xff]
  %v22 = vld [vmem:[%s0 + $0x8] sm:$0xff]
  %v23 = vld [vmem:[%s0 + $0x10] sm:$0xff]
  %v24 = vld [vmem:[%s0 + $0x18] sm:$0xff]
  %v25 = vpack.c.bf16 %v22, %v21
  %v26 = vpack.c.bf16 %v24, %v23
  %v27 = vld [vmem:[%s2] sm:$0x1]
  %v29 = vlaneseq
  %v30 = vshrl.u32 %v29, 7
  %v31 = vsub.s32 0, %v30
  %v32 = vrot.slane %v27, %v31
  %v40 = vunpack.c.l.b16 %v15
  %v41 = vunpack.c.l.b16 %v16
  %v42 = vunpack.c.l.b16 %v17
  %v43 = vunpack.c.l.b16 %v18
  %v44 = vunpack.c.l.b16 %v19
  %v45 = vunpack.c.l.b16 %v20
  %v46 = vpack.c.b16 %v41, %v40
  %v47 = vpack.c.b16 %v43, %v42
  %v48 = vpack.c.b16 %v45, %v44
  %vm52 = vcmask 392192
  %v54 = vsel %vm52, %v25, 0
  %v57 = vsel %vm52, %v26, 0
  %59 = vmatprep.subr.bf16.mxu0 0
  %60 = vmatpush1.bf16.msra.mxu0 %v46
  %61 = vmatprep.subr.bf16.mxu0 0
  %62 = vmatpush1.bf16.msra.mxu0 %v47
  %63 = vmatprep.subr.bf16.mxu0 0
  %64 = vmatpush1.bf16.msra.mxu0 %v48
  %65 = vmatprep.subr.bf16.mxu0 0
  %66 = vmatpush1.bf16.msra.mxu0 0
  %67 = vmatprep.subr.bf16.mxu0 0
  %68 = vmatpush1.bf16.msra.mxu0 0
  %69 = vmatprep.subr.bf16.mxu0 0
  %70 = vmatpush1.bf16.msra.mxu0 0
  %71 = vmatprep.subr.bf16.mxu0 0
  %72 = vmatpush1.bf16.msra.mxu0 0
  %73 = vmatprep.subr.bf16.mxu0 0
  %74 = vmatpush1.bf16.msra.mxu0 0
  %75 = vmatprep.subr.bf16.mxu0 0
  %76 = vmatpush1.bf16.msra.mxu0 0
  %77 = vmatprep.subr.bf16.mxu0 0
  %78 = vmatpush1.bf16.msra.mxu0 0
  %79 = vmatprep.subr.bf16.mxu0 0
  %80 = vmatpush1.bf16.msra.mxu0 0
  %81 = vmatprep.subr.bf16.mxu0 0
  %82 = vmatpush1.bf16.msra.mxu0 0
  %83 = vmatprep.subr.bf16.mxu0 0
  %84 = vmatpush1.bf16.msra.mxu0 0
  %85 = vmatprep.subr.bf16.mxu0 0
  %86 = vmatpush1.bf16.msra.mxu0 0
  %87 = vmatprep.subr.bf16.mxu0 0
  %88 = vmatpush1.bf16.msra.mxu0 0
  %89 = vmatprep.subr.bf16.mxu0 0
  %90 = vmatpush1.bf16.msra.mxu0 0
  %91 = vmatprep.mubr.bf16.mxu0 0
  %92 = vmatmul.mubr.bf16.gmra.mrb[0].mxu0 %v54
  %v93 = vpop.f32.mrb[0].mxu0
  %v94 = vadd.f32 %v32, %v93
  %v95 = vpop.f32.mrb[0].mxu0
  %v96 = vpop.f32.mrb[0].mxu0
  %v97 = vadd.f32 %v32, %v96
  %v98 = vpop.f32.mrb[0].mxu0
  %99 = vmatprep.mubr.bf16.mxu0 0
  %100 = vmatmul.mubr.bf16.gmra.mrb[0].mxu0 %v57
  %v101 = vpop.f32.mrb[0].mxu0
  %v102 = vadd.f32 %v32, %v101
  %v103 = vpop.f32.mrb[0].mxu0
  %v104 = vpop.f32.mrb[0].mxu0
  %v105 = vadd.f32 %v32, %v104
  %v106 = vpop.f32.mrb[0].mxu0
  %107 = vdwg.mxu0
  %vm108 = vcmask 261120
  %109 = vst.msk [vmem:[%s3] sm:$0xff] %vm108, %v94
  %110 = vst.msk [vmem:[%s3 + $0x8] sm:$0xff] %vm108, %v97
  %111 = vst.msk [vmem:[%s3 + $0x10] sm:$0xff] %vm108, %v102
  %112 = vst.msk [vmem:[%s3 + $0x18] sm:$0xff] %vm108, %v105
  // Predicated region
  $region14: #{resmlp_forward.3} parent=0 // pred_check
    _
  $region15: #{resmlp_forward.3} parent=0 // pred_check_branch
    %114 = sbr.rel (0) target = $region17
  $region16: #{resmlp_forward.3} parent=0 // pred_region
    _
  $region17: #{resmlp_forward.3} parent=0 // pred_fallthru
    _
  // Predicated region
  $region18: #{resmlp_forward.3} parent=0 // pred_check
    _
  $region19: #{resmlp_forward.3} parent=0 // pred_check_branch
    %116 = sbr.rel (0) target = $region21
  $region20: #{resmlp_forward.3} parent=0 // pred_region
    _
  $region21: #{resmlp_forward.3} parent=0 // pred_fallthru
    _

// kernel: resmlp_forward.5
$region0: #{resmlp_forward.5}
  #allocation0 [shape = 'u32[]', space=smem, size = 0x4, offset = 0x4, fixed_abs, tag = 'smem constant byte address 0x4 - core index']
  #allocation1 [shape = 'u32[144,128]{1,0:T(1,128)}', space=vmem, size = 0x12000, scoped, tag = 'internal scratch']
  %s0 = inlined_call_operand.vmem [shape: f32[2,16,32], index: 0, kind: input, shape index: {}]
  %s1 = inlined_call_operand.vmem [shape: f32[32,10], index: 1, kind: input, shape index: {}]
  %s2 = inlined_call_operand.vmem [shape: f32[1,10], index: 2, kind: input, shape index: {}]
  %s3 = inlined_call_operand.hbm [shape: f32[2,10], index: 3, kind: output, shape index: {}]
  %s4 = sld [smem:[#allocation0]]
  $region22: #{resmlp_forward.5} parent=0
    _
  %s6 = ssub.s32 1, %s4
  %s7 = scalar_select 0, %s6, %s4
  $region1: #{resmlp_forward.5} parent=0
    #allocation2 [shape = 'u8[1024]{0}', space=vmem, size = 0x400, scoped, tag = 'output window, operand 0, single buffered']
    #allocation3 [shape = 's32[1]{0}', space=sflag, size = 0x4, scoped, tag = 'scoped memory for resmlp_forward.5']
    %8 = vsyncpa [#allocation3], 0
    // Predicated region
    $region2: #{resmlp_forward.5} parent=1 // pred_check
      _
    $region3: #{resmlp_forward.5} parent=1 // pred_check_branch
      %10 = sbr.rel (0) target = $region5
    $region4: #{resmlp_forward.5} parent=1 // pred_region
      _
    $region5: #{resmlp_forward.5} parent=1 // pred_fallthru
      _
    // Predicated region
    $region6: #{resmlp_forward.5} parent=1 // pred_check
      _
    $region7: #{resmlp_forward.5} parent=1 // pred_check_branch
      %12 = sbr.rel (0) target = $region9
    $region8: #{resmlp_forward.5} parent=1 // pred_region
      _
    $region9: #{resmlp_forward.5} parent=1 // pred_fallthru
      _
    // Predicated region
    $region10: #{resmlp_forward.5} parent=1 // pred_check
      _
    $region11: #{resmlp_forward.5} parent=1 // pred_check_branch
      %14 = sbr.rel (0) target = $region13
    $region12: #{resmlp_forward.5} parent=1 // pred_region
      _
    $region13: #{resmlp_forward.5} parent=1 // pred_fallthru
      _
    %v15 = vld [vmem:[%s0] sm:$0xff]
    %v16 = vld [vmem:[%s0 + $0x8] sm:$0xff]
    %v17 = vld [vmem:[%s0 + $0x10] sm:$0xff]
    %v18 = vld [vmem:[%s0 + $0x18] sm:$0xff]
    %vm19 = vcmask 261120
    %v20 = vsel %vm19, %v15, 0.0
    %v21 = vsel %vm19, %v16, 0.0
    %v22 = vadd.f32 %v20, %v21
    %v23 = vrot.slane %v22, 4
    %v24 = vadd.f32 %v22, %v23
    %v25 = vrot.slane %v24, 2
    %v26 = vadd.f32 %v24, %v25
    %v27 = vrot.slane %v26, 1
    %v28 = vadd.f32 %v26, %v27
    %v29 = vsel %vm19, %v17, 0.0
    %v30 = vsel %vm19, %v18, 0.0
    %v31 = vadd.f32 %v29, %v30
    %v32 = vrot.slane %v31, 4
    %v33 = vadd.f32 %v31, %v32
    %v34 = vrot.slane %v33, 2
    %v35 = vadd.f32 %v33, %v34
    %v36 = vrot.slane %v35, 1
    %v37 = vadd.f32 %v35, %v36
    %v38 = vrcp.pop 16.0
    %v39 = vmul.f32 %v28, %v38
    %v40 = vmul.f32 %v37, %v38
    %v41 = vld [vmem:[%s1] sm:$0xff]
    %v42 = vld [vmem:[%s1 + $0x8] sm:$0xff]
    %v43 = vld [vmem:[%s1 + $0x10] sm:$0xff]
    %v44 = vld [vmem:[%s1 + $0x18] sm:$0xff]
    %v45 = vld [vmem:[%s2] sm:$0x1]
    %v47 = vlaneseq
    %v48 = vshrl.u32 %v47, 7
    %v49 = vsub.s32 0, %v48
    %v50 = vrot.slane %v45, %v49
    %vm54 = vcmask 1041409
    %v55 = vsel %vm54, %v40, %v39
    %v56 = vsel %vm19, %v55, 0
    %58 = vmatprep.subr.mxu0 0.0
    %59 = vmatpush1.msra.mxu0 %v41
    %60 = vmatprep.subr.mxu0 0.0
    %61 = vmatpush1.msra.mxu0 %v42
    %62 = vmatprep.subr.mxu0 0.0
    %63 = vmatpush1.msra.mxu0 %v43
    %64 = vmatprep.subr.mxu0 0.0
    %65 = vmatpush1.msra.mxu0 %v44
    %66 = vmatprep.subr.mxu0 0.0
    %67 = vmatpush1.msra.mxu0 0.0
    %68 = vmatprep.subr.mxu0 0.0
    %69 = vmatpush1.msra.mxu0 0.0
    %70 = vmatprep.subr.mxu0 0.0
    %71 = vmatpush1.msra.mxu0 0.0
    %72 = vmatprep.subr.mxu0 0.0
    %73 = vmatpush1.msra.mxu0 0.0
    %74 = vmatprep.subr.mxu0 0.0
    %75 = vmatpush1.msra.mxu0 0.0
    %76 = vmatprep.subr.mxu0 0.0
    %77 = vmatpush1.msra.mxu0 0.0
    %78 = vmatprep.subr.mxu0 0.0
    %79 = vmatpush1.msra.mxu0 0.0
    %80 = vmatprep.subr.mxu0 0.0
    %81 = vmatpush1.msra.mxu0 0.0
    %82 = vmatprep.subr.mxu0 0.0
    %83 = vmatpush1.msra.mxu0 0.0
    %84 = vmatprep.subr.mxu0 0.0
    %85 = vmatpush1.msra.mxu0 0.0
    %86 = vmatprep.subr.mxu0 0.0
    %87 = vmatpush1.msra.mxu0 0.0
    %88 = vmatprep.subr.mxu0 0.0
    %89 = vmatpush1.msra.mxu0 0.0
    %90 = vmatprep.subr.mxu0 0.0
    %91 = vmatpush1.msra.mxu0 0.0
    %92 = vmatprep.subr.mxu0 0.0
    %93 = vmatpush1.msra.mxu0 0.0
    %94 = vmatprep.subr.mxu0 0.0
    %95 = vmatpush1.msra.mxu0 0.0
    %96 = vmatprep.subr.mxu0 0.0
    %97 = vmatpush1.msra.mxu0 0.0
    %98 = vmatprep.subr.mxu0 0.0
    %99 = vmatpush1.msra.mxu0 0.0
    %100 = vmatprep.subr.mxu0 0.0
    %101 = vmatpush1.msra.mxu0 0.0
    %102 = vmatprep.subr.mxu0 0.0
    %103 = vmatpush1.msra.mxu0 0.0
    %104 = vmatprep.subr.mxu0 0.0
    %105 = vmatpush1.msra.mxu0 0.0
    %106 = vmatprep.subr.mxu0 0.0
    %107 = vmatpush1.msra.mxu0 0.0
    %108 = vmatprep.subr.mxu0 0.0
    %109 = vmatpush1.msra.mxu0 0.0
    %110 = vmatprep.subr.mxu0 0.0
    %111 = vmatpush1.msra.mxu0 0.0
    %112 = vmatprep.subr.mxu0 0.0
    %113 = vmatpush1.msra.mxu0 0.0
    %114 = vmatprep.subr.mxu0 0.0
    %115 = vmatpush1.msra.mxu0 0.0
    %116 = vmatprep.subr.mxu0 0.0
    %117 = vmatpush1.msra.mxu0 0.0
    %118 = vmatprep.subr.mxu0 0.0
    %119 = vmatpush1.msra.mxu0 0.0
    %120 = vmatprep.subr.mxu0 0.0
    %121 = vmatpush1.msra.mxu0 0.0
    %122 = vmatprep.mubr.f32.mxu0 0.0
    %123 = vmatmul.mubr.f32.gmra.mrb[0].mxu0 %v56
    %v124 = vpop.f32.mrb[0].mxu0
    %v125 = vadd.f32 %v50, %v124
    %v126 = vpop.f32.mrb[0].mxu0
    %127 = vdwg.mxu0
    %vm128 = vcmask 74752
    %129 = vst.msk [vmem:[#allocation2] sm:$0x3] %vm128, %v125
    // Predicated region
    $region14: #{resmlp_forward.5} parent=1 // pred_check
      _
    $region15: #{resmlp_forward.5} parent=1 // pred_check_branch
      %131 = sbr.rel (0) target = $region17
    $region16: #{resmlp_forward.5} parent=1 // pred_region
      %s133 = ssub.s32 32, 32
      %134 = vsyncadd [#allocation3], %s133
      %s136 = sshll.u32 [#allocation2], 4
      %s137 = int_to_ptr.vmem [resolvable:$true] %s136
      %139 = dma.vmem_to_hbm [thread:$0]  %s137, 32, %s3, [#allocation3]
    $region17: #{resmlp_forward.5} parent=1 // pred_fallthru
      _
    // Predicated region
    $region18: #{resmlp_forward.5} parent=1 // pred_check
      _
    $region19: #{resmlp_forward.5} parent=1 // pred_check_branch
      %141 = sbr.rel (0) target = $region21
    $region20: #{resmlp_forward.5} parent=1 // pred_region
      %142 = dma.done [#allocation3], 32
    $region21: #{resmlp_forward.5} parent=1 // pred_fallthru
      _
    %143 = vsyncpa [#allocation3], 1

// kernel: resmlp_forward.4
$region0: #{resmlp_forward.4}
  #allocation0 [shape = 'u32[]', space=smem, size = 0x4, offset = 0x4, fixed_abs, tag = 'smem constant byte address 0x4 - core index']
  #allocation1 [shape = 'u32[144,128]{1,0:T(1,128)}', space=vmem, size = 0x12000, scoped, tag = 'internal scratch']
  %s0 = inlined_call_operand.vmem [shape: f32[32,32], index: 0, kind: input, shape index: {}]
  %s1 = inlined_call_operand.vmem [shape: f32[2,8,32], index: 1, kind: input, shape index: {}]
  %s2 = inlined_call_operand.vmem [shape: bf16[2,16,16], index: 2, kind: input, shape index: {}]
  %s3 = inlined_call_operand.vmem [shape: f32[2,16,1], index: 3, kind: input, shape index: {}]
  %s4 = inlined_call_operand.vmem [shape: bf16[2,32,64], index: 4, kind: input, shape index: {}]
  %s5 = inlined_call_operand.vmem [shape: f32[2,1,64], index: 5, kind: input, shape index: {}]
  %s6 = inlined_call_operand.vmem [shape: bf16[2,64,32], index: 6, kind: input, shape index: {}]
  %s7 = inlined_call_operand.vmem [shape: f32[32,32], index: 7, kind: output, shape index: {}]
  %s8 = sld [smem:[#allocation0]]
  $region65: #{resmlp_forward.4} parent=0
    _
  %s10 = ssub.s32 1, %s8
  %s11 = scalar_select 0, %s10, %s8
  loop: start=0, step=1, limit=4
  $region2: #{resmlp_forward.4} parent=0 // loop_pre_header
    _
  $region3: #{resmlp_forward.4} parent=0 // loop_header
    %s13 = sphi 0, %s17
    %p14 = scmp.ge.s32.totalorder %s13, 4
    %s20 = sphi 0, %s32
    %s21 = sphi 0, %s28
    %s22 = sphi 0, %s20
    %s23 = sphi 0, %s21
    %s24 = sphi 0, %s22
    %s25 = sphi 0, %s23
    %s35 = sphi 0, %s37
    %s38 = sphi 0, %s35
    %s39 = sphi 0, %s38
    %s55 = sphi 0, %s39
    %s61 = sphi 0, %s63
    %s64 = sphi 0, %s61
    %s65 = sphi 0, %s64
    %s81 = sphi 0, %s65
    %s87 = sphi 0, %s89
    %s90 = sphi 0, %s87
    %s91 = sphi 0, %s90
    %s107 = sphi 0, %s91
    %s113 = sphi 0, %s115
    %s116 = sphi 0, %s113
    %s117 = sphi 0, %s116
    %s133 = sphi 0, %s117
    %s139 = sphi 0, %s141
    %s142 = sphi 0, %s139
    %s143 = sphi 0, %s142
    %s159 = sphi 0, %s143
    %s165 = sphi 0, %s167
    %s168 = sphi 0, %s165
    %s169 = sphi 0, %s168
    %s185 = sphi 0, %s169
    %s191 = sphi 0, %s193
    %s194 = sphi 0, %s191
    %s195 = sphi 0, %s194
    %s211 = sphi 0, %s195
    %s217 = sphi 0, %s219
    %s220 = sphi 0, %s217
    %s221 = sphi 0, %s220
    %s237 = sphi 0, %s221
  $region4: #{resmlp_forward.4} parent=0 // loop_header_branch
    %16 = sbr.rel (%p14) target = $region8
  $region5: #{resmlp_forward.4} parent=0 // loop_body
    %s18 = ssub.s32 %s13, 1
    %s19 = ssub.s32 %s13, 2
    %s26 = sadd.s32 1, %s21
    %p27 = scmp.ge.s32.totalorder %s26, 2
    %s28 = scalar_select %p27, 0, %s26
    %s29 = sadd.s32 1, %s20
    %s30 = scalar_select %p27, %s29, %s20
    %p31 = scmp.ge.s32.totalorder %s30, 1
    %s32 = scalar_select %p31, 0, %s30
    %s33 = ssub.s32 %s20, %s32
    %p34 = scmp.eq.s32.totalorder %s33, 0
    %s36 = sadd.s32 %s35, 1
    %s37 = scalar_select %p34, %s35, %s36
    %p40 = pneg %p34
    %p41 = scmp.eq.s32.totalorder %s13, 1
    %p42 = por %p40, %p41
    %p43 = scmp.ne.s32.totalorder %s35, %s38
    %p44 = scmp.eq.s32.totalorder %s13, 0
    %p45 = por %p43, %p44
    %p46 = scmp.ne.s32.totalorder %s35, %s38
    %p47 = scmp.eq.s32.totalorder %s18, 1
    %p48 = por %p46, %p47
    %p49 = scmp.ne.s32.totalorder %s38, %s39
    %p50 = scmp.eq.s32.totalorder %s18, 0
    %p51 = por %p49, %p50
    %p52 = scmp.ne.s32.totalorder %s38, %s39
    %p53 = scmp.eq.s32.totalorder %s19, 1
    %p54 = por %p52, %p53
    %p56 = scmp.ne.s32.totalorder %s39, %s55
    %p57 = scmp.eq.s32.totalorder %s19, 0
    %p58 = por %p56, %p57
    %s59 = ssub.s32 %s21, %s28
    %p60 = scmp.eq.s32.totalorder %s59, 0
    %s62 = sadd.s32 %s61, 1
    %s63 = scalar_select %p60, %s61, %s62
    %p66 = pneg %p60
    %p67 = scmp.eq.s32.totalorder %s13, 1
    %p68 = por %p66, %p67
    %p69 = scmp.ne.s32.totalorder %s61, %s64
    %p70 = scmp.eq.s32.totalorder %s13, 0
    %p71 = por %p69, %p70
    %p72 = scmp.ne.s32.totalorder %s61, %s64
    %p73 = scmp.eq.s32.totalorder %s18, 1
    %p74 = por %p72, %p73
    %p75 = scmp.ne.s32.totalorder %s64, %s65
    %p76 = scmp.eq.s32.totalorder %s18, 0
    %p77 = por %p75, %p76
    %p78 = scmp.ne.s32.totalorder %s64, %s65
    %p79 = scmp.eq.s32.totalorder %s19, 1
    %p80 = por %p78, %p79
    %p82 = scmp.ne.s32.totalorder %s65, %s81
    %p83 = scmp.eq.s32.totalorder %s19, 0
    %p84 = por %p82, %p83
    %s85 = ssub.s32 %s21, %s28
    %p86 = scmp.eq.s32.totalorder %s85, 0
    %s88 = sadd.s32 %s87, 1
    %s89 = scalar_select %p86, %s87, %s88
    %p92 = pneg %p86
    %p93 = scmp.eq.s32.totalorder %s13, 1
    %p94 = por %p92, %p93
    %p95 = scmp.ne.s32.totalorder %s87, %s90
    %p96 = scmp.eq.s32.totalorder %s13, 0
    %p97 = por %p95, %p96
    %p98 = scmp.ne.s32.totalorder %s87, %s90
    %p99 = scmp.eq.s32.totalorder %s18, 1
    %p100 = por %p98, %p99
    %p101 = scmp.ne.s32.totalorder %s90, %s91
    %p102 = scmp.eq.s32.totalorder %s18, 0
    %p103 = por %p101, %p102
    %p104 = scmp.ne.s32.totalorder %s90, %s91
    %p105 = scmp.eq.s32.totalorder %s19, 1
    %p106 = por %p104, %p105
    %p108 = scmp.ne.s32.totalorder %s91, %s107
    %p109 = scmp.eq.s32.totalorder %s19, 0
    %p110 = por %p108, %p109
    %s111 = ssub.s32 %s21, %s28
    %p112 = scmp.eq.s32.totalorder %s111, 0
    %s114 = sadd.s32 %s113, 1
    %s115 = scalar_select %p112, %s113, %s114
    %p118 = pneg %p112
    %p119 = scmp.eq.s32.totalorder %s13, 1
    %p120 = por %p118, %p119
    %p121 = scmp.ne.s32.totalorder %s113, %s116
    %p122 = scmp.eq.s32.totalorder %s13, 0
    %p123 = por %p121, %p122
    %p124 = scmp.ne.s32.totalorder %s113, %s116
    %p125 = scmp.eq.s32.totalorder %s18, 1
    %p126 = por %p124, %p125
    %p127 = scmp.ne.s32.totalorder %s116, %s117
    %p128 = scmp.eq.s32.totalorder %s18, 0
    %p129 = por %p127, %p128
    %p130 = scmp.ne.s32.totalorder %s116, %s117
    %p131 = scmp.eq.s32.totalorder %s19, 1
    %p132 = por %p130, %p131
    %p134 = scmp.ne.s32.totalorder %s117, %s133
    %p135 = scmp.eq.s32.totalorder %s19, 0
    %p136 = por %p134, %p135
    %s137 = ssub.s32 %s21, %s28
    %p138 = scmp.eq.s32.totalorder %s137, 0
    %s140 = sadd.s32 %s139, 1
    %s141 = scalar_select %p138, %s139, %s140
    %p144 = pneg %p138
    %p145 = scmp.eq.s32.totalorder %s13, 1
    %p146 = por %p144, %p145
    %p147 = scmp.ne.s32.totalorder %s139, %s142
    %p148 = scmp.eq.s32.totalorder %s13, 0
    %p149 = por %p147, %p148
    %p150 = scmp.ne.s32.totalorder %s139, %s142
    %p151 = scmp.eq.s32.totalorder %s18, 1
    %p152 = por %p150, %p151
    %p153 = scmp.ne.s32.totalorder %s142, %s143
    %p154 = scmp.eq.s32.totalorder %s18, 0
    %p155 = por %p153, %p154
    %p156 = scmp.ne.s32.totalorder %s142, %s143
    %p157 = scmp.eq.s32.totalorder %s19, 1
    %p158 = por %p156, %p157
    %p160 = scmp.ne.s32.totalorder %s143, %s159
    %p161 = scmp.eq.s32.totalorder %s19, 0
    %p162 = por %p160, %p161
    %s163 = ssub.s32 %s21, %s28
    %p164 = scmp.eq.s32.totalorder %s163, 0
    %s166 = sadd.s32 %s165, 1
    %s167 = scalar_select %p164, %s165, %s166
    %p170 = pneg %p164
    %p171 = scmp.eq.s32.totalorder %s13, 1
    %p172 = por %p170, %p171
    %p173 = scmp.ne.s32.totalorder %s165, %s168
    %p174 = scmp.eq.s32.totalorder %s13, 0
    %p175 = por %p173, %p174
    %p176 = scmp.ne.s32.totalorder %s165, %s168
    %p177 = scmp.eq.s32.totalorder %s18, 1
    %p178 = por %p176, %p177
    %p179 = scmp.ne.s32.totalorder %s168, %s169
    %p180 = scmp.eq.s32.totalorder %s18, 0
    %p181 = por %p179, %p180
    %p182 = scmp.ne.s32.totalorder %s168, %s169
    %p183 = scmp.eq.s32.totalorder %s19, 1
    %p184 = por %p182, %p183
    %p186 = scmp.ne.s32.totalorder %s169, %s185
    %p187 = scmp.eq.s32.totalorder %s19, 0
    %p188 = por %p186, %p187
    %s189 = ssub.s32 %s21, %s28
    %p190 = scmp.eq.s32.totalorder %s189, 0
    %s192 = sadd.s32 %s191, 1
    %s193 = scalar_select %p190, %s191, %s192
    %p196 = pneg %p190
    %p197 = scmp.eq.s32.totalorder %s13, 1
    %p198 = por %p196, %p197
    %p199 = scmp.ne.s32.totalorder %s191, %s194
    %p200 = scmp.eq.s32.totalorder %s13, 0
    %p201 = por %p199, %p200
    %p202 = scmp.ne.s32.totalorder %s191, %s194
    %p203 = scmp.eq.s32.totalorder %s18, 1
    %p204 = por %p202, %p203
    %p205 = scmp.ne.s32.totalorder %s194, %s195
    %p206 = scmp.eq.s32.totalorder %s18, 0
    %p207 = por %p205, %p206
    %p208 = scmp.ne.s32.totalorder %s194, %s195
    %p209 = scmp.eq.s32.totalorder %s19, 1
    %p210 = por %p208, %p209
    %p212 = scmp.ne.s32.totalorder %s195, %s211
    %p213 = scmp.eq.s32.totalorder %s19, 0
    %p214 = por %p212, %p213
    %s215 = ssub.s32 %s20, %s32
    %p216 = scmp.eq.s32.totalorder %s215, 0
    %s218 = sadd.s32 %s217, 1
    %s219 = scalar_select %p216, %s217, %s218
    %p222 = pneg %p216
    %p223 = scmp.eq.s32.totalorder %s13, 1
    %p224 = por %p222, %p223
    %p225 = scmp.ne.s32.totalorder %s217, %s220
    %p226 = scmp.eq.s32.totalorder %s13, 0
    %p227 = por %p225, %p226
    %p228 = scmp.ne.s32.totalorder %s217, %s220
    %p229 = scmp.eq.s32.totalorder %s18, 1
    %p230 = por %p228, %p229
    %p231 = scmp.ne.s32.totalorder %s220, %s221
    %p232 = scmp.eq.s32.totalorder %s18, 0
    %p233 = por %p231, %p232
    %p234 = scmp.ne.s32.totalorder %s220, %s221
    %p235 = scmp.eq.s32.totalorder %s19, 1
    %p236 = por %p234, %p235
    %p238 = scmp.ne.s32.totalorder %s221, %s237
    %p239 = scmp.eq.s32.totalorder %s19, 0
    %p240 = por %p238, %p239
    %p241 = scmp.le.s32.totalorder 1, %s13
    %p242 = scmp.lt.s32.totalorder %s13, 3
    %p243 = pnand %p241, %p242
    %p244 = pneg %p243
    // Predicated region
    $region9: #{resmlp_forward.4} parent=5 // pred_check
      _
    $region10: #{resmlp_forward.4} parent=5 // pred_check_branch
      %246 = sbr.rel (%p243) target = $region12
    $region11: #{resmlp_forward.4} parent=5 // pred_region
      %s247 = ssub.s32 %s13, 1
      // Predicated region
      $region13: #{resmlp_forward.4} parent=11 // pred_check
        %p248 = pneg %p51
      $region14: #{resmlp_forward.4} parent=11 // pred_check_branch
        %250 = sbr.rel (%p248) target = $region16
      $region15: #{resmlp_forward.4} parent=11 // pred_region
        %s251 = smul.u32 4, %s22
        %p252 = scmp.lt.s32.totalorder %s251, 3
        %s253 = scalar_select %p252, %s251, 3
        %s254 = smul.addr %s253, 8
        %s255 = scalar_lea.vmem %s0, %s254
        %s256 = smul.u32 4, %s22
      $region16: #{resmlp_forward.4} parent=11 // pred_fallthru
        _
    $region12: #{resmlp_forward.4} parent=5 // pred_fallthru
      _
    %p257 = scmp.lt.s32.totalorder %s13, 2
    // Predicated region
    $region17: #{resmlp_forward.4} parent=5 // pred_check
      %p258 = pneg %p257
    $region18: #{resmlp_forward.4} parent=5 // pred_check_branch
      %260 = sbr.rel (%p258) target = $region20
    $region19: #{resmlp_forward.4} parent=5 // pred_region
      // Predicated region
      $region21: #{resmlp_forward.4} parent=19 // pred_check
        %p261 = pneg %p71
      $region22: #{resmlp_forward.4} parent=19 // pred_check_branch
        %263 = sbr.rel (%p261) target = $region24
      $region23: #{resmlp_forward.4} parent=19 // pred_region
        %p264 = scmp.lt.s32.totalorder %s21, 1
        %s265 = scalar_select %p264, %s21, 1
        %s266 = smul.addr %s265, 8
        %s267 = scalar_lea.vmem %s1, %s266
      $region24: #{resmlp_forward.4} parent=19 // pred_fallthru
        _
      // Predicated region
      $region25: #{resmlp_forward.4} parent=19 // pred_check
        %p268 = pneg %p97
      $region26: #{resmlp_forward.4} parent=19 // pred_check_branch
        %270 = sbr.rel (%p268) target = $region28
      $region27: #{resmlp_forward.4} parent=19 // pred_region
        %p271 = scmp.lt.s32.totalorder %s21, 1
        %s272 = scalar_select %p271, %s21, 1
        %s273 = smul.addr %s272, 2
        %s274 = smul.addr %s273, 4
        %s275 = scalar_lea.vmem %s2, %s274
      $region28: #{resmlp_forward.4} parent=19 // pred_fallthru
        _
      // Predicated region
      $region29: #{resmlp_forward.4} parent=19 // pred_check
        %p276 = pneg %p123
      $region30: #{resmlp_forward.4} parent=19 // pred_check_branch
        %278 = sbr.rel (%p276) target = $region32
      $region31: #{resmlp_forward.4} parent=19 // pred_region
        %p279 = scmp.lt.s32.totalorder %s21, 1
        %s280 = scalar_select %p279, %s21, 1
        %s281 = smul.addr %s280, 2
        %s282 = smul.addr %s281, 8
        %s283 = scalar_lea.vmem %s3, %s282
      $region32: #{resmlp_forward.4} parent=19 // pred_fallthru
        _
      // Predicated region
      $region33: #{resmlp_forward.4} parent=19 // pred_check
        %p284 = pneg %p149
      $region34: #{resmlp_forward.4} parent=19 // pred_check_branch
        %286 = sbr.rel (%p284) target = $region36
      $region35: #{resmlp_forward.4} parent=19 // pred_region
        %p287 = scmp.lt.s32.totalorder %s21, 1
        %s288 = scalar_select %p287, %s21, 1
        %s289 = smul.addr %s288, 4
        %s290 = smul.addr %s289, 4
        %s291 = scalar_lea.vmem %s4, %s290
      $region36: #{resmlp_forward.4} parent=19 // pred_fallthru
        _
      // Predicated region
      $region37: #{resmlp_forward.4} parent=19 // pred_check
        %p292 = pneg %p175
      $region38: #{resmlp_forward.4} parent=19 // pred_check_branch
        %294 = sbr.rel (%p292) target = $region40
      $region39: #{resmlp_forward.4} parent=19 // pred_region
        %p295 = scmp.lt.s32.totalorder %s21, 1
        %s296 = scalar_select %p295, %s21, 1
        %s297 = scalar_lea.vmem %s5, %s296
      $region40: #{resmlp_forward.4} parent=19 // pred_fallthru
        _
      // Predicated region
      $region41: #{resmlp_forward.4} parent=19 // pred_check
        %p298 = pneg %p201
      $region42: #{resmlp_forward.4} parent=19 // pred_check_branch
        %300 = sbr.rel (%p298) target = $region44
      $region43: #{resmlp_forward.4} parent=19 // pred_region
        %p301 = scmp.lt.s32.totalorder %s21, 1
        %s302 = scalar_select %p301, %s21, 1
        %s303 = smul.addr %s302, 8
        %s304 = smul.addr %s303, 4
        %s305 = scalar_lea.vmem %s6, %s304
      $region44: #{resmlp_forward.4} parent=19 // pred_fallthru
        _
    $region20: #{resmlp_forward.4} parent=5 // pred_fallthru
      _
    %p306 = scmp.le.s32.totalorder 1, %s13
    %p307 = scmp.lt.s32.totalorder %s13, 3
    %p308 = pnand %p306, %p307
    %p309 = pneg %p308
    // Predicated region
    $region45: #{resmlp_forward.4} parent=5 // pred_check
      _
    $region46: #{resmlp_forward.4} parent=5 // pred_check_branch
      %311 = sbr.rel (%p308) target = $region48
    $region47: #{resmlp_forward.4} parent=5 // pred_region
      %s312 = ssub.s32 %s13, 1
      %s313 = smul.u32 4, %s22
      %p314 = scmp.lt.s32.totalorder %s313, 3
      %s315 = scalar_select %p314, %s313, 3
      %s316 = smul.addr %s315, 8
      %s317 = scalar_lea.vmem %s0, %s316
      %p318 = pneg %p51
      %p319 = pneg %p48
      %p320 = scmp.lt.s32.totalorder %s23, 1
      %s321 = scalar_select %p320, %s23, 1
      %s322 = smul.addr %s321, 8
      %s323 = scalar_lea.vmem %s1, %s322
      %p324 = pneg %p77
      %p325 = pneg %p74
      %p326 = scmp.lt.s32.totalorder %s23, 1
      %s327 = scalar_select %p326, %s23, 1
      %s328 = smul.addr %s327, 2
      %s329 = smul.addr %s328, 4
      %s330 = scalar_lea.vmem %s2, %s329
      %p331 = pneg %p103
      %p332 = pneg %p100
      %p333 = scmp.lt.s32.totalorder %s23, 1
      %s334 = scalar_select %p333, %s23, 1
      %s335 = smul.addr %s334, 2
      %s336 = smul.addr %s335, 8
      %s337 = scalar_lea.vmem %s3, %s336
      %p338 = pneg %p129
      %p339 = pneg %p126
      %p340 = scmp.lt.s32.totalorder %s23, 1
      %s341 = scalar_select %p340, %s23, 1
      %s342 = smul.addr %s341, 4
      %s343 = smul.addr %s342, 4
      %s344 = scalar_lea.vmem %s4, %s343
      %p345 = pneg %p155
      %p346 = pneg %p152
      %p347 = scmp.lt.s32.totalorder %s23, 1
      %s348 = scalar_select %p347, %s23, 1
      %s349 = scalar_lea.vmem %s5, %s348
      %p350 = pneg %p181
      %p351 = pneg %p178
      %p352 = scmp.lt.s32.totalorder %s23, 1
      %s353 = scalar_select %p352, %s23, 1
      %s354 = smul.addr %s353, 8
      %s355 = smul.addr %s354, 4
      %s356 = scalar_lea.vmem %s6, %s355
      %p357 = pneg %p207
      %p358 = pneg %p204
      %p359 = pneg %p233
      %p360 = pneg %p230
      %s361 = smul.u32 4, %s22
      %p362 = scmp.lt.s32.totalorder %s361, 3
      %s363 = scalar_select %p362, %s361, 3
      %s364 = smul.addr %s363, 8
      %s365 = scalar_lea.vmem %s7, %s364
      %s366 = smul.u32 4, %s22
      %p367 = scmp.lt.s32.totalorder %s366, 3
      %s368 = scalar_select %p367, %s366, 3
      %s369 = smul.addr %s368, 8
      %s370 = scalar_lea.vmem %s0, %s369
      %s371 = smul.u32 4, %s22
      %p372 = scmp.lt.s32.totalorder %s23, 1
      %s373 = scalar_select %p372, %s23, 1
      %s374 = smul.addr %s373, 8
      %s375 = scalar_lea.vmem %s1, %s374
      %p376 = scmp.lt.s32.totalorder %s23, 1
      %s377 = scalar_select %p376, %s23, 1
      %s378 = smul.addr %s377, 2
      %s379 = smul.addr %s378, 4
      %s380 = scalar_lea.vmem %s2, %s379
      %p381 = scmp.lt.s32.totalorder %s23, 1
      %s382 = scalar_select %p381, %s23, 1
      %s383 = smul.addr %s382, 2
      %s384 = smul.addr %s383, 8
      %s385 = scalar_lea.vmem %s3, %s384
      %p386 = scmp.lt.s32.totalorder %s23, 1
      %s387 = scalar_select %p386, %s23, 1
      %s388 = smul.addr %s387, 4
      %s389 = smul.addr %s388, 4
      %s390 = scalar_lea.vmem %s4, %s389
      %p391 = scmp.lt.s32.totalorder %s23, 1
      %s392 = scalar_select %p391, %s23, 1
      %s393 = scalar_lea.vmem %s5, %s392
      %p394 = scmp.lt.s32.totalorder %s23, 1
      %s395 = scalar_select %p394, %s23, 1
      %s396 = smul.addr %s395, 8
      %s397 = smul.addr %s396, 4
      %s398 = scalar_lea.vmem %s6, %s397
      %s399 = smul.u32 4, %s22
      %p400 = scmp.lt.s32.totalorder %s399, 3
      %s401 = scalar_select %p400, %s399, 3
      %s402 = smul.addr %s401, 8
      %s403 = scalar_lea.vmem %s7, %s402
      %s404 = smul.u32 4, %s22
      %p406 = scmp.eq.s32.totalorder %s23, 0
      // Predicated region
      $region49: #{resmlp_forward.4} parent=47 // pred_check
        %p407 = pneg %p406
      $region50: #{resmlp_forward.4} parent=47 // pred_check_branch
        %409 = sbr.rel (%p407) target = $region52
      $region51: #{resmlp_forward.4} parent=47 // pred_region
        %v410 = vld [vmem:[%s370] sm:$0xff]
        %v411 = vld [vmem:[%s370 + $0x8] sm:$0xff]
        %v412 = vld [vmem:[%s370 + $0x10] sm:$0xff]
        %v413 = vld [vmem:[%s370 + $0x18] sm:$0xff]
        %vm414 = vcmask 261120
        %415 = vst.msk [vmem:[%s403] sm:$0xff] %vm414, %v410
        %416 = vst.msk [vmem:[%s403 + $0x8] sm:$0xff] %vm414, %v411
        %417 = vst.msk [vmem:[%s403 + $0x10] sm:$0xff] %vm414, %v412
        %418 = vst.msk [vmem:[%s403 + $0x18] sm:$0xff] %vm414, %v413
      $region52: #{resmlp_forward.4} parent=47 // pred_fallthru
        _
      %v419 = vld [vmem:[%s403] sm:$0xff]
      %v420 = vld [vmem:[%s403 + $0x8] sm:$0xff]
      %v421 = vld [vmem:[%s403 + $0x10] sm:$0xff]
      %v422 = vld [vmem:[%s403 + $0x18] sm:$0xff]
      %v423 = vld [vmem:[%s375] sm:$0x1]
      %v424 = vld [vmem:[%s375 + $0x1] sm:$0x1]
      %v425 = vld [vmem:[%s375 + $0x2] sm:$0x1]
      %v426 = vld [vmem:[%s375 + $0x3] sm:$0x1]
      %v427 = vld [vmem:[%s375 + $0x4] sm:$0x1]
      %v428 = vld [vmem:[%s375 + $0x5] sm:$0x1]
      %v429 = vld [vmem:[%s375 + $0x6] sm:$0x1]
      %v430 = vlaneseq
      %v431 = vshrl.u32 %v430, 7
      %v432 = vsub.s32 0, %v431
      %v433 = vrot.slane %v423, %v432
      %v434 = vmul.f32 %v419, %v433
      %v435 = vmul.f32 %v420, %v433
      %v436 = vmul.f32 %v421, %v433
      %v437 = vmul.f32 %v422, %v433
      %v438 = vlaneseq
      %v439 = vshrl.u32 %v438, 7
      %v440 = vsub.s32 0, %v439
      %v441 = vrot.slane %v424, %v440
      %v442 = vadd.f32 %v434, %v441
      %v443 = vadd.f32 %v435, %v441
      %v444 = vadd.f32 %v436, %v441
      %v445 = vadd.f32 %v437, %v441
      %v446 = vld [vmem:[%s380] sm:$0xf]
      %v447 = vld [vmem:[%s380 + $0x4] sm:$0xf]
      %v448 = vpack.c.bf16 %v443, %v442
      %v449 = vpack.c.bf16 %v445, %v444
      %v450 = vld [vmem:[%s385] sm:$0xff]
      %v451 = vld [vmem:[%s385 + $0x8] sm:$0xff]
      %453 = vset.pattern.permute.xlu0 0
      %454 = vperm.xlu0 %453, %v450
      %v455 = vpop.permute.xlu0 %454
      %458 = vset.pattern.permute.xlu0 0
      %459 = vperm.xlu0 %458, %v451
      %v460 = vpop.permute.xlu0 %459
      %v464 = vunpack.c.l.b16 %v446
      %v465 = vunpack.c.l.b16 %v447
      %v466 = vpack.c.b16 %v465, %v464
      %vm467 = vcmask 130048
      %v469 = vsel %vm467, %v466, 0
      %471 = vmatprep.subr.bf16.mxu0 0
      %472 = vmatpush1.bf16.msra.mxu0 %v448
      %473 = vmatprep.subr.bf16.mxu0 0
      %474 = vmatpush1.bf16.msra.mxu0 0
      %475 = vmatprep.subr.bf16.mxu0 0
      %476 = vmatpush1.bf16.msra.mxu0 0
      %477 = vmatprep.subr.bf16.mxu0 0
      %478 = vmatpush1.bf16.msra.mxu0 0
      %479 = vmatprep.subr.bf16.mxu0 0
      %480 = vmatpush1.bf16.msra.mxu0 0
      %481 = vmatprep.subr.bf16.mxu0 0
      %482 = vmatpush1.bf16.msra.mxu0 0
      %483 = vmatprep.subr.bf16.mxu0 0
      %484 = vmatpush1.bf16.msra.mxu0 0
      %485 = vmatprep.subr.bf16.mxu0 0
      %486 = vmatpush1.bf16.msra.mxu0 0
      %487 = vmatprep.subr.bf16.mxu0 0
      %488 = vmatpush1.bf16.msra.mxu0 0
      %489 = vmatprep.subr.bf16.mxu0 0
      %490 = vmatpush1.bf16.msra.mxu0 0
      %491 = vmatprep.subr.bf16.mxu0 0
      %492 = vmatpush1.bf16.msra.mxu0 0
      %493 = vmatprep.subr.bf16.mxu0 0
      %494 = vmatpush1.bf16.msra.mxu0 0
      %495 = vmatprep.subr.bf16.mxu0 0
      %496 = vmatpush1.bf16.msra.mxu0 0
      %497 = vmatprep.subr.bf16.mxu0 0
      %498 = vmatpush1.bf16.msra.mxu0 0
      %499 = vmatprep.subr.bf16.mxu0 0
      %500 = vmatpush1.bf16.msra.mxu0 0
      %501 = vmatprep.subr.bf16.mxu0 0
      %502 = vmatpush1.bf16.msra.mxu0 0
      %503 = vmatprep.mubr.bf16.mxu0 0
      %504 = vmatmul.mubr.bf16.gmra.mrb[0].mxu0 %v469
      %v505 = vpop.f32.mrb[0].mxu0
      %v506 = vadd.f32 %v455, %v505
      %v507 = vpop.f32.mrb[0].mxu0
      %v508 = vpop.f32.mrb[0].mxu0
      %v509 = vadd.f32 %v460, %v508
      %v510 = vpop.f32.mrb[0].mxu0
      %511 = vdwg.mxu0
      %512 = vmatprep.subr.bf16.mxu0 0
      %513 = vmatpush1.bf16.msra.mxu0 %v449
      %514 = vmatprep.subr.bf16.mxu0 0
      %515 = vmatpush1.bf16.msra.mxu0 0
      %516 = vmatprep.subr.bf16.mxu0 0
      %517 = vmatpush1.bf16.msra.mxu0 0
      %518 = vmatprep.subr.bf16.mxu0 0
      %519 = vmatpush1.bf16.msra.mxu0 0
      %520 = vmatprep.subr.bf16.mxu0 0
      %521 = vmatpush1.bf16.msra.mxu0 0
      %522 = vmatprep.subr.bf16.mxu0 0
      %523 = vmatpush1.bf16.msra.mxu0 0
      %524 = vmatprep.subr.bf16.mxu0 0
      %525 = vmatpush1.bf16.msra.mxu0 0
      %526 = vmatprep.subr.bf16.mxu0 0
      %527 = vmatpush1.bf16.msra.mxu0 0
      %528 = vmatprep.subr.bf16.mxu0 0
      %529 = vmatpush1.bf16.msra.mxu0 0
      %530 = vmatprep.subr.bf16.mxu0 0
      %531 = vmatpush1.bf16.msra.mxu0 0
      %532 = vmatprep.subr.bf16.mxu0 0
      %533 = vmatpush1.bf16.msra.mxu0 0
      %534 = vmatprep.subr.bf16.mxu0 0
      %535 = vmatpush1.bf16.msra.mxu0 0
      %536 = vmatprep.subr.bf16.mxu0 0
      %537 = vmatpush1.bf16.msra.mxu0 0
      %538 = vmatprep.subr.bf16.mxu0 0
      %539 = vmatpush1.bf16.msra.mxu0 0
      %540 = vmatprep.subr.bf16.mxu0 0
      %541 = vmatpush1.bf16.msra.mxu0 0
      %542 = vmatprep.subr.bf16.mxu0 0
      %543 = vmatpush1.bf16.msra.mxu0 0
      %544 = vmatprep.mubr.bf16.mxu0 0
      %545 = vmatmul.mubr.bf16.gmra.mrb[0].mxu0 %v469
      %v546 = vpop.f32.mrb[0].mxu0
      %v547 = vadd.f32 %v455, %v546
      %v548 = vpop.f32.mrb[0].mxu0
      %v549 = vpop.f32.mrb[0].mxu0
      %v550 = vadd.f32 %v460, %v549
      %v551 = vpop.f32.mrb[0].mxu0
      %552 = vdwg.mxu0
      %v553 = vlaneseq
      %v554 = vshrl.u32 %v553, 7
      %v555 = vsub.s32 0, %v554
      %v556 = vrot.slane %v425, %v555
      %v557 = vmul.f32 %v556, %v506
      %v558 = vmul.f32 %v556, %v509
      %v559 = vmul.f32 %v556, %v547
      %v560 = vmul.f32 %v556, %v550
      %v561 = vadd.f32 %v442, %v557
      %v562 = vadd.f32 %v443, %v558
      %v563 = vadd.f32 %v444, %v559
      %v564 = vadd.f32 %v445, %v560
      %v565 = vlaneseq
      %v566 = vshrl.u32 %v565, 7
      %v567 = vsub.s32 0, %v566
      %v568 = vrot.slane %v426, %v567
      %v569 = vmul.f32 %v561, %v568
      %v570 = vmul.f32 %v562, %v568
      %v571 = vmul.f32 %v563, %v568
      %v572 = vmul.f32 %v564, %v568
      %v573 = vlaneseq
      %v574 = vshrl.u32 %v573, 7
      %v575 = vsub.s32 0, %v574
      %v576 = vrot.slane %v427, %v575
      %v577 = vadd.f32 %v569, %v576
      %v578 = vadd.f32 %v570, %v576
      %v579 = vadd.f32 %v571, %v576
      %v580 = vadd.f32 %v572, %v576
      %v581 = vld [vmem:[%s390] sm:$0xf]
      %v582 = vld [vmem:[%s390 + $0x4] sm:$0xf]
      %v583 = vld [vmem:[%s390 + $0x8] sm:$0xf]
      %v584 = vld [vmem:[%s390 + $0xc] sm:$0xf]
      %v585 = vpack.c.bf16 %v578, %v577
      %v586 = vpack.c.bf16 %v580, %v579
      %v587 = vld [vmem:[%s393] sm:$0x1]
      %v589 = vlaneseq
      %v590 = vshrl.u32 %v589, 7
      %v591 = vsub.s32 0, %v590
      %v592 = vrot.slane %v587, %v591
      %v598 = vunpack.c.l.b16 %v581
      %v599 = vunpack.c.l.b16 %v582
      %v600 = vunpack.c.l.b16 %v583
      %v601 = vunpack.c.l.b16 %v584
      %v602 = vpack.c.b16 %v599, %v598
      %v603 = vpack.c.b16 %v601, %v600
      %vm606 = vcmask 261120
      %v608 = vsel %vm606, %v585, 0
      %v611 = vsel %vm606, %v586, 0
      %613 = vmatprep.subr.bf16.mxu0 0
      %614 = vmatpush1.bf16.msra.mxu0 %v602
      %615 = vmatprep.subr.bf16.mxu0 0
      %616 = vmatpush1.bf16.msra.mxu0 %v603
      %617 = vmatprep.subr.bf16.mxu0 0
      %618 = vmatpush1.bf16.msra.mxu0 0
      %619 = vmatprep.subr.bf16.mxu0 0
      %620 = vmatpush1.bf16.msra.mxu0 0
      %621 = vmatprep.subr.bf16.mxu0 0
      %622 = vmatpush1.bf16.msra.mxu0 0
      %623 = vmatprep.subr.bf16.mxu0 0
      %624 = vmatpush1.bf16.msra.mxu0 0
      %625 = vmatprep.subr.bf16.mxu0 0
      %626 = vmatpush1.bf16.msra.mxu0 0
      %627 = vmatprep.subr.bf16.mxu0 0
      %628 = vmatpush1.bf16.msra.mxu0 0
      %629 = vmatprep.subr.bf16.mxu0 0
      %630 = vmatpush1.bf16.msra.mxu0 0
      %631 = vmatprep.subr.bf16.mxu0 0
      %632 = vmatpush1.bf16.msra.mxu0 0
      %633 = vmatprep.subr.bf16.mxu0 0
      %634 = vmatpush1.bf16.msra.mxu0 0
      %635 = vmatprep.subr.bf16.mxu0 0
      %636 = vmatpush1.bf16.msra.mxu0 0
      %637 = vmatprep.subr.bf16.mxu0 0
      %638 = vmatpush1.bf16.msra.mxu0 0
      %639 = vmatprep.subr.bf16.mxu0 0
      %640 = vmatpush1.bf16.msra.mxu0 0
      %641 = vmatprep.subr.bf16.mxu0 0
      %642 = vmatpush1.bf16.msra.mxu0 0
      %643 = vmatprep.subr.bf16.mxu0 0
      %644 = vmatpush1.bf16.msra.mxu0 0
      %645 = vmatprep.mubr.bf16.mxu0 0
      %646 = vmatmul.mubr.bf16.gmra.mrb[0].mxu0 %v608
      %v647 = vpop.f32.mrb[0].mxu0
      %v648 = vadd.f32 %v592, %v647
      %v649 = vpop.f32.mrb[0].mxu0
      %v650 = vpop.f32.mrb[0].mxu0
      %v651 = vadd.f32 %v592, %v650
      %v652 = vpop.f32.mrb[0].mxu0
      %653 = vmatprep.mubr.bf16.mxu0 0
      %654 = vmatmul.mubr.bf16.gmra.mrb[0].mxu0 %v611
      %v655 = vpop.f32.mrb[0].mxu0
      %v656 = vadd.f32 %v592, %v655
      %v657 = vpop.f32.mrb[0].mxu0
      %v658 = vpop.f32.mrb[0].mxu0
      %v659 = vadd.f32 %v592, %v658
      %v660 = vpop.f32.mrb[0].mxu0
      %661 = vdwg.mxu0
      %v662 = vmul.f32 %v648, 0.5
      %v663 = vmul.f32 %v651, 0.5
      %v664 = vmul.f32 %v656, 0.5
      %v665 = vmul.f32 %v659, 0.5
      %v666 = vmul.f32 %v648, 0.70710677
      %v667 = vmul.f32 %v651, 0.70710677
      %v668 = vmul.f32 %v656, 0.70710677
      %v669 = vmul.f32 %v659, 0.70710677
      %v670 = verf.f32.pop %v666
      %v671 = verf.f32.pop %v667
      %v672 = verf.f32.pop %v668
      %v673 = verf.f32.pop %v669
      %v674 = vadd.f32 %v670, 1.0
      %v675 = vadd.f32 %v671, 1.0
      %v676 = vadd.f32 %v672, 1.0
      %v677 = vadd.f32 %v673, 1.0
      %v678 = vmul.f32 %v662, %v674
      %v679 = vmul.f32 %v663, %v675
      %v680 = vmul.f32 %v664, %v676
      %v681 = vmul.f32 %v665, %v677
      %v682 = vld [vmem:[%s398] sm:$0xf]
      %v683 = vld [vmem:[%s398 + $0x4] sm:$0xf]
      %v684 = vld [vmem:[%s398 + $0x8] sm:$0xf]
      %v685 = vld [vmem:[%s398 + $0xc] sm:$0xf]
      %v686 = vld [vmem:[%s398 + $0x10] sm:$0xf]
      %v687 = vld [vmem:[%s398 + $0x14] sm:$0xf]
      %v688 = vld [vmem:[%s398 + $0x18] sm:$0xf]
      %v689 = vld [vmem:[%s398 + $0x1c] sm:$0xf]
      %v690 = vpack.c.bf16 %v679, %v678
      %v691 = vpack.c.bf16 %v681, %v680
      %v692 = vlaneseq
      %v693 = vshrl.u32 %v692, 7
      %v694 = vsub.s32 0, %v693
      %v695 = vrot.slane %v429, %v694
      %v704 = vunpack.c.l.b16 %v682
      %v705 = vunpack.c.l.b16 %v683
      %v706 = vunpack.c.l.b16 %v684
      %v707 = vunpack.c.l.b16 %v685
      %v708 = vunpack.c.l.b16 %v686
      %v709 = vunpack.c.l.b16 %v687
      %v710 = vunpack.c.l.b16 %v688
      %v711 = vunpack.c.l.b16 %v689
      %v712 = vpack.c.b16 %v705, %v704
      %v713 = vpack.c.b16 %v707, %v706
      %v714 = vpack.c.b16 %v709, %v708
      %v715 = vpack.c.b16 %v711, %v710
      %vm720 = vcmask 523264
      %v722 = vsel %vm720, %v690, 0
      %v725 = vsel %vm720, %v691, 0
      %727 = vmatprep.subr.bf16.mxu0 0
      %728 = vmatpush1.bf16.msra.mxu0 %v712
      %729 = vmatprep.subr.bf16.mxu0 0
      %730 = vmatpush1.bf16.msra.mxu0 %v713
      %731 = vmatprep.subr.bf16.mxu0 0
      %732 = vmatpush1.bf16.msra.mxu0 %v714
      %733 = vmatprep.subr.bf16.mxu0 0
      %734 = vmatpush1.bf16.msra.mxu0 %v715
      %735 = vmatprep.subr.bf16.mxu0 0
      %736 = vmatpush1.bf16.msra.mxu0 0
      %737 = vmatprep.subr.bf16.mxu0 0
      %738 = vmatpush1.bf16.msra.mxu0 0
      %739 = vmatprep.subr.bf16.mxu0 0
      %740 = vmatpush1.bf16.msra.mxu0 0
      %741 = vmatprep.subr.bf16.mxu0 0
      %742 = vmatpush1.bf16.msra.mxu0 0
      %743 = vmatprep.subr.bf16.mxu0 0
      %744 = vmatpush1.bf16.msra.mxu0 0
      %745 = vmatprep.subr.bf16.mxu0 0
      %746 = vmatpush1.bf16.msra.mxu0 0
      %747 = vmatprep.subr.bf16.mxu0 0
      %748 = vmatpush1.bf16.msra.mxu0 0
      %749 = vmatprep.subr.bf16.mxu0 0
      %750 = vmatpush1.bf16.msra.mxu0 0
      %751 = vmatprep.subr.bf16.mxu0 0
      %752 = vmatpush1.bf16.msra.mxu0 0
      %753 = vmatprep.subr.bf16.mxu0 0
      %754 = vmatpush1.bf16.msra.mxu0 0
      %755 = vmatprep.subr.bf16.mxu0 0
      %756 = vmatpush1.bf16.msra.mxu0 0
      %757 = vmatprep.subr.bf16.mxu0 0
      %758 = vmatpush1.bf16.msra.mxu0 0
      %759 = vmatprep.mubr.bf16.mxu0 0
      %760 = vmatmul.mubr.bf16.gmra.mrb[0].mxu0 %v722
      %v761 = vpop.f32.mrb[0].mxu0
      %v762 = vadd.f32 %v695, %v761
      %v763 = vpop.f32.mrb[0].mxu0
      %v764 = vpop.f32.mrb[0].mxu0
      %v765 = vadd.f32 %v695, %v764
      %v766 = vpop.f32.mrb[0].mxu0
      %767 = vmatprep.mubr.bf16.mxu0 0
      %768 = vmatmul.mubr.bf16.gmra.mrb[0].mxu0 %v725
      %v769 = vpop.f32.mrb[0].mxu0
      %v770 = vadd.f32 %v695, %v769
      %v771 = vpop.f32.mrb[0].mxu0
      %v772 = vpop.f32.mrb[0].mxu0
      %v773 = vadd.f32 %v695, %v772
      %v774 = vpop.f32.mrb[0].mxu0
      %775 = vdwg.mxu0
      %v776 = vlaneseq
      %v777 = vshrl.u32 %v776, 7
      %v778 = vsub.s32 0, %v777
      %v779 = vrot.slane %v428, %v778
      %v780 = vmul.f32 %v779, %v762
      %v781 = vmul.f32 %v779, %v765
      %v782 = vmul.f32 %v779, %v770
      %v783 = vmul.f32 %v779, %v773
      %v784 = vadd.f32 %v577, %v780
      %v785 = vadd.f32 %v578, %v781
      %v786 = vadd.f32 %v579, %v782
      %v787 = vadd.f32 %v580, %v783
      %788 = vst.msk [vmem:[%s403] sm:$0xff] %vm606, %v784
      %789 = vst.msk [vmem:[%s403 + $0x8] sm:$0xff] %vm606, %v785
      %790 = vst.msk [vmem:[%s403 + $0x10] sm:$0xff] %vm606, %v786
      %791 = vst.msk [vmem:[%s403 + $0x18] sm:$0xff] %vm606, %v787
      %s792 = smul.u32 4, %s22
      %p793 = scmp.lt.s32.totalorder %s792, 3
      %s794 = scalar_select %p793, %s792, 3
      %s795 = smul.addr %s794, 8
      %s796 = scalar_lea.vmem %s7, %s795
      // Predicated region
      $region53: #{resmlp_forward.4} parent=47 // pred_check
        %p797 = pneg %p230
      $region54: #{resmlp_forward.4} parent=47 // pred_check_branch
        %799 = sbr.rel (%p797) target = $region56
      $region55: #{resmlp_forward.4} parent=47 // pred_region
        %s800 = smul.u32 4, %s22
      $region56: #{resmlp_forward.4} parent=47 // pred_fallthru
        _
      // Predicated region
      $region57: #{resmlp_forward.4} parent=47 // pred_check
        %p801 = pneg %p230
      $region58: #{resmlp_forward.4} parent=47 // pred_check_branch
        %803 = sbr.rel (%p801) target = $region60
      $region59: #{resmlp_forward.4} parent=47 // pred_region
        %s804 = smul.u32 4, %s22
        %p805 = scmp.lt.s32.totalorder %s804, 3
        %s806 = scalar_select %p805, %s804, 3
        %s807 = smul.addr %s806, 8
        %s808 = scalar_lea.vmem %s7, %s807
      $region60: #{resmlp_forward.4} parent=47 // pred_fallthru
        _
    $region48: #{resmlp_forward.4} parent=5 // pred_fallthru
      _
    %p809 = scmp.le.s32.totalorder 2, %s13
    // Predicated region
    $region61: #{resmlp_forward.4} parent=5 // pred_check
      %p810 = pneg %p809
    $region62: #{resmlp_forward.4} parent=5 // pred_check_branch
      %812 = sbr.rel (%p810) target = $region64
    $region63: #{resmlp_forward.4} parent=5 // pred_region
      %s813 = ssub.s32 %s13, 2
    $region64: #{resmlp_forward.4} parent=5 // pred_fallthru
      _
  $region6: #{resmlp_forward.4} parent=0 // loop_footer
    %s17 = sadd.s32 1, %s13
  $region7: #{resmlp_forward.4} parent=0 // loop_footer_branch
    %12 = sbr.rel target = $region3
  $region8: #{resmlp_forward.4} parent=0 // loop_exit
    _

</llo_original>
